<compile_context>
chip_gen: v7x
topology: tpu7x:2x2x1
jax: 0.10.0
libtpu: 0.0.40
codegen_flags: <defaults>
</compile_context>

<pallas_src>
import math

import jax
import jax.numpy as jnp
from jax.experimental import pallas as pl
from jax.experimental.pallas import tpu as pltpu

INPUT_SIZE = 4                       # LSTMCell input size (loss[2] ++ grad[2])
HIDDEN_SIZE = 20                     # LSTMCell hidden size
GATE_PITCH = 24                      # each gate's 20 rows padded to 24 (sublane aligned)
N_OUT_ROWS = 2 * HIDDEN_SIZE + 3     # h(20) | c(20) | f(1) | i(1) | c_next(1)


# --------------------------------------------------------------------------
# Pallas kernel (lane-dense: n_params lives on the 128-wide lane axis)
# --------------------------------------------------------------------------
def _metalearner_kernel(gT_ref, ct_ref, gn_ref, wb_ref, wm_ref, out_ref):
    H, GP = HIDDEN_SIZE, GATE_PITCH

    gT = gT_ref[...]                                   # [2, TP]  grad.T (lane-dense)
    wb = wb_ref[...]                                   # [3*GP, 3] gate rows (i,o,g); cols 0:2 = W_ih grad cols,
                                                       #            col 2 = b_ih+b_hh + W_ih[:, :2]@loss (loss folded in)

    # ---- nn.LSTMCell, h_prev = c_prev = 0  =>  forget gate and W_hh are dead ----
    pre = (jnp.dot(wb[:, 0:2], gT, preferred_element_type=jnp.float32)
           + wb[:, 2:3])                               # [3*GP, TP]
    sig = jax.nn.sigmoid(pre[0:2 * GP, :])             # one contiguous sigmoid slab (i | o)
    i_g = sig[0:H, :]                                  # [H, TP]
    o_g = sig[GP:GP + H, :]                            # [H, TP]
    g_g = jnp.tanh(pre[2 * GP:2 * GP + H, :])          # [H, TP]

    c_lstm = i_g * g_g                                 # c_prev == 0
    h_lstm = o_g * jnp.tanh(c_lstm)                    # [H, TP]

    # ---- MetaLearnerLSTMCell, f_prev = i_prev = 0, c_prev = ct param ----
    c_prev = ct_ref[...]                               # [1, TP]
    gnp = gn_ref[...]                                  # [1, TP]

    wm = wm_ref[...]                                   # [2, H+2] rows (f, i); cols 0:H = W_h, H = W_c, H+1 = bias
    meta_pre = (jnp.dot(wm[:, 0:H], h_lstm, preferred_element_type=jnp.float32)
                + wm[:, H:H + 1] * c_prev + wm[:, H + 1:H + 2])   # [2, TP]
    s = jax.nn.sigmoid(meta_pre)                       # row 0 = f_next, row 1 = i_next
    c_n = s[0:1, :] * c_prev - s[1:2, :] * gnp         # [1, TP]

    # packed output slab: full-lane stores only
    out_ref[0:H, :] = h_lstm
    out_ref[H:2 * H, :] = c_lstm
    out_ref[2 * H:2 * H + 2, :] = s
    out_ref[2 * H + 2:2 * H + 3, :] = c_n


# --------------------------------------------------------------------------
# Wrapper
# --------------------------------------------------------------------------
def metalearner_forward(loss, grad, grad_noproc, params, tile_p=None):
    """Forward pass of MetaLearnerNet (hidden_state=None path).

    loss:         [1, 2]
    grad:         [n_params, 2]
    grad_noproc:  [n_params, 1]
    returns (ct_squeezed, [(lstm_h, lstm_c), [f_next, i_next, c_next]])
    """
    # TODO(synk): recurrent (hidden_state is not None) multi-step path not wired up;
    # it would need W_hh, the LSTM forget gate, and the Wf[H+1]/Wi[H+1] terms back.
    P = grad.shape[0]
    H, GP = HIDDEN_SIZE, GATE_PITCH
    f32 = jnp.float32

    if tile_p is None:
        # Kernel is HBM-store bound: use big lane tiles. 8192 keeps the live set
        # (~10 MB) inside every generation's default scoped VMEM (v5e 16 MiB,
        # v6e/v7x 32 MiB). No forced grid>=2 split (no gain on single-TC chips).
        tile_p = int(min(8192, ((P + 127) // 128) * 128))
    else:
        tile_p = int((tile_p + 127) // 128 * 128)
    grid = (pl.cdiv(P, tile_p),)                       # ragged last block handled by Pallas

    # ---- lane-dense activation inputs (n_params -> lanes), no concat / no pad ----
    gT = grad.T.astype(f32)                            # [2, P]
    ctT = params["ct"].T.astype(f32)                   # [1, P]
    gnT = grad_noproc.T.astype(f32)                    # [1, P]

    # ---- fused LSTMCell weights: only (i, o, g); forget gate & W_hh are dead ----
    # loss is folded into the bias:  bias' = b_ih + b_hh + W_ih[:, 0:2] @ loss
    w_ih = params["w_ih"].astype(f32)                  # [4H, 4] torch gate order i,f,g,o
    bias = (params["b_ih"] + params["b_hh"]).astype(f32) \
        + w_ih[:, 0:2] @ loss.reshape(2).astype(f32)   # [4H]

    def gate_block(row0):
        blk = jnp.concatenate([w_ih[row0:row0 + H, 2:4],
                               bias[row0:row0 + H, None]], axis=1)     # [H, 3]
        return jnp.pad(blk, ((0, GP - H), (0, 0)))                     # [GP, 3]

    wb_gates = jnp.concatenate(
        [gate_block(0),                                # i
         gate_block(3 * H),                            # o
         gate_block(2 * H)],                           # g
        axis=0)                                        # [3*GP, 3]

    # ---- fused meta-cell weights: rows (f, i); cols 0:H hidden, H = c coeff, H+1 = bias
    # Wf[H+1]/Wi[H+1] multiply f_prev/i_prev == 0 and are dropped.
    Wf, Wi = params["Wf"].astype(f32), params["Wi"].astype(f32)        # [H+2, 1]
    wm_ext = jnp.stack([
        jnp.concatenate([Wf[0:H, 0], Wf[H:H + 1, 0], params["bf"].astype(f32)[0]]),
        jnp.concatenate([Wi[0:H, 0], Wi[H:H + 1, 0], params["bi"].astype(f32)[0]]),
    ], axis=0)                                         # [2, H+2]

    lane_spec = lambda rows: pl.BlockSpec((rows, tile_p), lambda i: (0, i))
    full_spec = lambda shape: pl.BlockSpec(shape, lambda i: (0, 0))

    packed = pl.pallas_call(
        _metalearner_kernel,
        out_shape=jax.ShapeDtypeStruct((N_OUT_ROWS, P), f32),
        grid=grid,
        in_specs=[lane_spec(2),                        # grad.T
                  lane_spec(1),                        # ct.T
                  lane_spec(1),                        # grad_noproc.T
                  full_spec((3 * GP, 3)),              # fused gate weights
                  full_spec((2, H + 2))],              # fused meta weights
        out_specs=lane_spec(N_OUT_ROWS),
        compiler_params=pltpu.CompilerParams(
            dimension_semantics=("parallel",),
            vmem_limit_bytes=32 * 1024 * 1024),
    )(gT, ctT, gnT, wb_gates, wm_ext)                  # [43, P] lane-dense, no pad lanes

    # ---- collapsed epilogue: ct straight off the slab, ONE transpose for the rest ----
    ct_squeezed = packed[2 * H + 2]                    # [P]
    pT = packed.T                                      # single [43,P] -> [P,43] transpose
    h_lstm = pT[:, 0:H]                                # [P, H]
    c_lstm = pT[:, H:2 * H]                            # [P, H]
    f_next = pT[:, 2 * H:2 * H + 1]                    # [P, 1]
    i_next = pT[:, 2 * H + 1:2 * H + 2]                # [P, 1]
    c_next = pT[:, 2 * H + 2:2 * H + 3]                # [P, 1]
    # TODO(synk): bf16 output slab / dropping f,i rows would cut ~45% of store bytes
    # but changes the module's returned dtypes/values; kept exact f32 semantics here.

    return ct_squeezed, [(h_lstm, c_lstm), [f_next, i_next, c_next]]


# --------------------------------------------------------------------------
# Deterministic parameter initialization (mirrors the PyTorch inits)
# --------------------------------------------------------------------------
def init_params(key, n_params, input_size=INPUT_SIZE, hidden_size=HIDDEN_SIZE):
    ks = jax.random.split(key, 9)
    k = 1.0 / math.sqrt(hidden_size)
    u = lambda kk, shape, lo, hi: jax.random.uniform(kk, shape, jnp.float32, lo, hi)
    return dict(
        # nn.LSTMCell default init: U(-1/sqrt(H), 1/sqrt(H))
        w_ih=u(ks[0], (4 * hidden_size, input_size), -k, k),
        w_hh=u(ks[1], (4 * hidden_size, hidden_size), -k, k),
        b_ih=u(ks[2], (4 * hidden_size,), -k, k),
        b_hh=u(ks[3], (4 * hidden_size,), -k, k),
        # MetaLearnerLSTMCell init
        Wf=u(ks[4], (hidden_size + 2, 1), -0.01, 0.01),
        Wi=u(ks[5], (hidden_size + 2, 1), -0.01, 0.01),
        bf=u(ks[6], (1, 1), 4.0, 6.0),
        bi=u(ks[7], (1, 1), -5.0, -4.0),
        ct=u(ks[8], (n_params, 1), -0.01, 0.01),
    )


# --------------------------------------------------------------------------
# Pure-JAX reference (for correctness check)
# --------------------------------------------------------------------------
def reference_forward(loss, grad, grad_noproc, params):
    H = HIDDEN_SIZE
    x = jnp.concatenate([jnp.broadcast_to(loss, grad.shape), grad], axis=1)
    gates = x @ params["w_ih"].T + params["b_ih"] + params["b_hh"]
    i = jax.nn.sigmoid(gates[:, 0:H])
    f = jax.nn.sigmoid(gates[:, H:2 * H])
    g = jnp.tanh(gates[:, 2 * H:3 * H])
    o = jax.nn.sigmoid(gates[:, 3 * H:4 * H])
    c = f * 0.0 + i * g
    h = o * jnp.tanh(c)
    P = grad.shape[0]
    c_prev = params["ct"]
    zeros = jnp.zeros((P, 1), jnp.float32)
    f_n = jax.nn.sigmoid(
        jnp.concatenate([h, c_prev, zeros], 1) @ params["Wf"] + params["bf"])
    i_n = jax.nn.sigmoid(
        jnp.concatenate([h, c_prev, zeros], 1) @ params["Wi"] + params["bi"])
    c_n = f_n * c_prev - i_n * grad_noproc
    return jnp.squeeze(c_n, axis=1), h, c, f_n, i_n


# --------------------------------------------------------------------------
if __name__ == "__main__":
    key = jax.random.PRNGKey(0)
    n_params = 300   # deliberately NOT a multiple of 128: exercises the ragged lane block

    kp, k1, k2, k3 = jax.random.split(key, 4)
    params = init_params(kp, n_params)
    loss = jax.random.normal(k1, (1, 2), jnp.float32)
    grad = jax.random.normal(k2, (n_params, 2), jnp.float32)
    grad_noproc = jax.random.normal(k3, (n_params, 1), jnp.float32)

    fwd = jax.jit(metalearner_forward)
    ct_out, hidden = fwd(loss, grad, grad_noproc, params)
    (h_lstm, c_lstm), (f_next, i_next, c_next) = hidden[0], hidden[1]
    jax.block_until_ready(ct_out)

    # correctness check against pure-JAX reference
    ref_ct, ref_h, ref_c, ref_f, ref_i = reference_forward(
        loss, grad, grad_noproc, params)
    assert ct_out.shape == (n_params,)
    assert jnp.allclose(ct_out, ref_ct, atol=1e-5), "ct mismatch"
    assert jnp.allclose(h_lstm, ref_h, atol=1e-5), "lstm hidden mismatch"
    assert jnp.allclose(c_lstm, ref_c, atol=1e-5), "lstm cell mismatch"
    assert jnp.allclose(f_next, ref_f, atol=1e-5), "meta f mismatch"
    assert jnp.allclose(i_next, ref_i, atol=1e-5), "meta i mismatch"

    # extra coverage: multi-step grid + ragged last block (tile_p forced small)
    ct_small, _ = metalearner_forward(loss, grad, grad_noproc, params, tile_p=128)
    jax.block_until_ready(ct_small)
    assert jnp.allclose(ct_small, ref_ct, atol=1e-5), "ct mismatch (tile_p=128)"

    print("KERNEL_OK")
</pallas_src>

<mosaic_0001>
module attributes {stable_mosaic.version = 11 : i64} {
  func.func @_metalearner_kernel(%arg0: i32, %arg1: memref<2x384xf32, #tpu.memory_space<vmem>>, %arg2: memref<1x384xf32, #tpu.memory_space<vmem>>, %arg3: memref<1x384xf32, #tpu.memory_space<vmem>>, %arg4: memref<72x3xf32, #tpu.memory_space<vmem>>, %arg5: memref<2x22xf32, #tpu.memory_space<vmem>>, %arg6: memref<43x384xf32, #tpu.memory_space<vmem>>) attributes {dimension_semantics = [#tpu.dimension_semantics<parallel>], iteration_bounds = array<i64: 1>, scalar_prefetch = 0 : i64, scratch_operands = 0 : i64, tpu.core_type = #tpu.core_type<tc>, window_params = [{transform_indices = @transform_0, window_bounds = array<i64: 2, 384>}, {transform_indices = @transform_1, window_bounds = array<i64: 1, 384>}, {transform_indices = @transform_2, window_bounds = array<i64: 1, 384>}, {pipeline_mode = #tpu.pipeline_mode<synchronous>, transform_indices = @transform_3, window_bounds = array<i64: 72, 3>}, {pipeline_mode = #tpu.pipeline_mode<synchronous>, transform_indices = @transform_4, window_bounds = array<i64: 2, 22>}, {transform_indices = @transform_5, window_bounds = array<i64: 43, 384>}]} {
    %c0 = arith.constant 0 : index
    %c0_0 = arith.constant 0 : index
    %0 = vector.load %arg1[%c0, %c0_0] : memref<2x384xf32, #tpu.memory_space<vmem>>, vector<2x384xf32>
    %c0_1 = arith.constant 0 : index
    %c0_2 = arith.constant 0 : index
    %1 = vector.load %arg4[%c0_1, %c0_2] : memref<72x3xf32, #tpu.memory_space<vmem>>, vector<72x3xf32>
    %2 = vector.extract_strided_slice %1 {offsets = [0, 0], sizes = [72, 2], strides = [1, 1]} : vector<72x3xf32> to vector<72x2xf32>
    %cst = arith.constant dense<0.000000e+00> : vector<72x384xf32>
    %3 = tpu.matmul %2, %0, %cst {dimension_numbers = #tpu.dot_dimension_numbers<[1], [0], [0], [1], [0, 0, 1, 1], [], []>} : vector<72x2xf32>, vector<2x384xf32>, vector<72x384xf32> -> vector<72x384xf32>
    %4 = vector.extract_strided_slice %1 {offsets = [0, 2], sizes = [72, 1], strides = [1, 1]} : vector<72x3xf32> to vector<72x1xf32>
    %5 = vector.broadcast %4 : vector<72x1xf32> to vector<72x384xf32>
    %6 = arith.addf %3, %5 : vector<72x384xf32>
    %7 = vector.extract_strided_slice %6 {offsets = [0, 0], sizes = [48, 384], strides = [1, 1]} : vector<72x384xf32> to vector<48x384xf32>
    %8 = arith.negf %7 : vector<48x384xf32>
    %9 = math.exp %8 : vector<48x384xf32>
    %cst_3 = arith.constant 1.000000e+00 : f32
    %10 = vector.broadcast %cst_3 : f32 to vector<48x384xf32>
    %11 = arith.addf %10, %9 : vector<48x384xf32>
    %12 = arith.divf %10, %11 : vector<48x384xf32>
    %13 = vector.extract_strided_slice %12 {offsets = [0, 0], sizes = [20, 384], strides = [1, 1]} : vector<48x384xf32> to vector<20x384xf32>
    %14 = vector.extract_strided_slice %12 {offsets = [24, 0], sizes = [20, 384], strides = [1, 1]} : vector<48x384xf32> to vector<20x384xf32>
    %15 = vector.extract_strided_slice %6 {offsets = [48, 0], sizes = [20, 384], strides = [1, 1]} : vector<72x384xf32> to vector<20x384xf32>
    %16 = math.tanh %15 : vector<20x384xf32>
    %17 = arith.mulf %13, %16 : vector<20x384xf32>
    %18 = math.tanh %17 : vector<20x384xf32>
    %19 = arith.mulf %14, %18 : vector<20x384xf32>
    %c0_4 = arith.constant 0 : index
    %c0_5 = arith.constant 0 : index
    %20 = vector.load %arg2[%c0_4, %c0_5] : memref<1x384xf32, #tpu.memory_space<vmem>>, vector<1x384xf32>
    %c0_6 = arith.constant 0 : index
    %c0_7 = arith.constant 0 : index
    %21 = vector.load %arg3[%c0_6, %c0_7] : memref<1x384xf32, #tpu.memory_space<vmem>>, vector<1x384xf32>
    %c0_8 = arith.constant 0 : index
    %c0_9 = arith.constant 0 : index
    %22 = vector.load %arg5[%c0_8, %c0_9] : memref<2x22xf32, #tpu.memory_space<vmem>>, vector<2x22xf32>
    %23 = vector.extract_strided_slice %22 {offsets = [0, 0], sizes = [2, 20], strides = [1, 1]} : vector<2x22xf32> to vector<2x20xf32>
    %cst_10 = arith.constant dense<0.000000e+00> : vector<2x384xf32>
    %24 = tpu.matmul %23, %19, %cst_10 {dimension_numbers = #tpu.dot_dimension_numbers<[1], [0], [0], [1], [0, 0, 1, 1], [], []>} : vector<2x20xf32>, vector<20x384xf32>, vector<2x384xf32> -> vector<2x384xf32>
    %25 = vector.extract_strided_slice %22 {offsets = [0, 20], sizes = [2, 1], strides = [1, 1]} : vector<2x22xf32> to vector<2x1xf32>
    %26 = vector.broadcast %25 : vector<2x1xf32> to vector<2x384xf32>
    %27 = vector.broadcast %20 : vector<1x384xf32> to vector<2x384xf32>
    %28 = arith.mulf %26, %27 : vector<2x384xf32>
    %29 = arith.addf %24, %28 : vector<2x384xf32>
    %30 = vector.extract_strided_slice %22 {offsets = [0, 21], sizes = [2, 1], strides = [1, 1]} : vector<2x22xf32> to vector<2x1xf32>
    %31 = vector.broadcast %30 : vector<2x1xf32> to vector<2x384xf32>
    %32 = arith.addf %29, %31 : vector<2x384xf32>
    %33 = arith.negf %32 : vector<2x384xf32>
    %34 = math.exp %33 : vector<2x384xf32>
    %cst_11 = arith.constant 1.000000e+00 : f32
    %35 = vector.broadcast %cst_11 : f32 to vector<2x384xf32>
    %36 = arith.addf %35, %34 : vector<2x384xf32>
    %37 = arith.divf %35, %36 : vector<2x384xf32>
    %38 = vector.extract_strided_slice %37 {offsets = [0, 0], sizes = [1, 384], strides = [1, 1]} : vector<2x384xf32> to vector<1x384xf32>
    %39 = arith.mulf %38, %20 : vector<1x384xf32>
    %40 = vector.extract_strided_slice %37 {offsets = [1, 0], sizes = [1, 384], strides = [1, 1]} : vector<2x384xf32> to vector<1x384xf32>
    %41 = arith.mulf %40, %21 : vector<1x384xf32>
    %42 = arith.subf %39, %41 : vector<1x384xf32>
    %c0_12 = arith.constant 0 : index
    %c0_13 = arith.constant 0 : index
    %43 = vector.load %arg6[%c0_12, %c0_13] : memref<43x384xf32, #tpu.memory_space<vmem>>, vector<20x384xf32>
    tpu.vector_store %arg6[%c0_12, %c0_13], %19 {strides = array<i32>} : memref<43x384xf32, #tpu.memory_space<vmem>>, vector<20x384xf32>,
    %c20 = arith.constant 20 : index
    %c0_14 = arith.constant 0 : index
    %44 = vector.load %arg6[%c20, %c0_14] : memref<43x384xf32, #tpu.memory_space<vmem>>, vector<20x384xf32>
    tpu.vector_store %arg6[%c20, %c0_14], %17 {strides = array<i32>} : memref<43x384xf32, #tpu.memory_space<vmem>>, vector<20x384xf32>,
    %c40 = arith.constant 40 : index
    %c0_15 = arith.constant 0 : index
    %45 = vector.load %arg6[%c40, %c0_15] : memref<43x384xf32, #tpu.memory_space<vmem>>, vector<2x384xf32>
    tpu.vector_store %arg6[%c40, %c0_15], %37 {strides = array<i32>} : memref<43x384xf32, #tpu.memory_space<vmem>>, vector<2x384xf32>,
    %c42 = arith.constant 42 : index
    %c0_16 = arith.constant 0 : index
    %46 = vector.load %arg6[%c42, %c0_16] : memref<43x384xf32, #tpu.memory_space<vmem>>, vector<1x384xf32>
    tpu.vector_store %arg6[%c42, %c0_16], %42 {strides = array<i32>} : memref<43x384xf32, #tpu.memory_space<vmem>>, vector<1x384xf32>,
    return
  }
  func.func @transform_0(%arg0: i32) -> (i32, i32) {
    %c0_i32 = arith.constant 0 : i32
    %c0_i32_0 = arith.constant 0 : i32
    return %c0_i32, %arg0 : i32, i32
  }
  func.func @transform_1(%arg0: i32) -> (i32, i32) {
    %c0_i32 = arith.constant 0 : i32
    %c0_i32_0 = arith.constant 0 : i32
    return %c0_i32, %arg0 : i32, i32
  }
  func.func @transform_2(%arg0: i32) -> (i32, i32) {
    %c0_i32 = arith.constant 0 : i32
    %c0_i32_0 = arith.constant 0 : i32
    return %c0_i32, %arg0 : i32, i32
  }
  func.func @transform_3(%arg0: i32) -> (i32, i32) {
    %c0_i32 = arith.constant 0 : i32
    %c0_i32_0 = arith.constant 0 : i32
    %c0_i32_1 = arith.constant 0 : i32
    return %c0_i32, %c0_i32_0 : i32, i32
  }
  func.func @transform_4(%arg0: i32) -> (i32, i32) {
    %c0_i32 = arith.constant 0 : i32
    %c0_i32_0 = arith.constant 0 : i32
    %c0_i32_1 = arith.constant 0 : i32
    return %c0_i32, %c0_i32_0 : i32, i32
  }
  func.func @transform_5(%arg0: i32) -> (i32, i32) {
    %c0_i32 = arith.constant 0 : i32
    %c0_i32_0 = arith.constant 0 : i32
    return %c0_i32, %arg0 : i32, i32
  }
}

</mosaic_0001>

<llo_original>
// kernel: metalearner_forward.1
$region0: #{metalearner_forward.1}
  #allocation0 [shape = 'u32[]', space=smem, size = 0x4, offset = 0x4, fixed_abs, tag = 'smem constant byte address 0x4 - core index']
  #allocation1 [shape = 'u32[144,128]{1,0:T(1,128)}', space=vmem, size = 0x12000, scoped, tag = 'internal scratch']
  %s0 = inlined_call_operand.vmem [shape: f32[2,300], index: 0, kind: input, shape index: {}]
  %s1 = inlined_call_operand.vmem [shape: f32[1,300], index: 1, kind: input, shape index: {}]
  %s2 = inlined_call_operand.vmem [shape: f32[1,300], index: 2, kind: input, shape index: {}]
  %s3 = inlined_call_operand.vmem [shape: f32[72,3], index: 3, kind: input, shape index: {}]
  %s4 = inlined_call_operand.vmem [shape: f32[2,22], index: 4, kind: input, shape index: {}]
  %s5 = inlined_call_operand.vmem [shape: f32[43,300], index: 5, kind: output, shape index: {}]
  %s6 = sld [smem:[#allocation0]]
  $region30: #{metalearner_forward.1} parent=0
    _
  %s8 = ssub.s32 1, %s6
  %s9 = scalar_select 0, %s8, %s6
  // Predicated region
  $region2: #{metalearner_forward.1} parent=0 // pred_check
    _
  $region3: #{metalearner_forward.1} parent=0 // pred_check_branch
    %11 = sbr.rel (0) target = $region5
  $region4: #{metalearner_forward.1} parent=0 // pred_region
    _
  $region5: #{metalearner_forward.1} parent=0 // pred_fallthru
    _
  // Predicated region
  $region6: #{metalearner_forward.1} parent=0 // pred_check
    _
  $region7: #{metalearner_forward.1} parent=0 // pred_check_branch
    %13 = sbr.rel (0) target = $region9
  $region8: #{metalearner_forward.1} parent=0 // pred_region
    _
  $region9: #{metalearner_forward.1} parent=0 // pred_fallthru
    _
  // Predicated region
  $region10: #{metalearner_forward.1} parent=0 // pred_check
    _
  $region11: #{metalearner_forward.1} parent=0 // pred_check_branch
    %15 = sbr.rel (0) target = $region13
  $region12: #{metalearner_forward.1} parent=0 // pred_region
    _
  $region13: #{metalearner_forward.1} parent=0 // pred_fallthru
    _
  // Predicated region
  $region14: #{metalearner_forward.1} parent=0 // pred_check
    _
  $region15: #{metalearner_forward.1} parent=0 // pred_check_branch
    %17 = sbr.rel (0) target = $region17
  $region16: #{metalearner_forward.1} parent=0 // pred_region
    _
  $region17: #{metalearner_forward.1} parent=0 // pred_fallthru
    _
  // Predicated region
  $region18: #{metalearner_forward.1} parent=0 // pred_check
    _
  $region19: #{metalearner_forward.1} parent=0 // pred_check_branch
    %19 = sbr.rel (0) target = $region21
  $region20: #{metalearner_forward.1} parent=0 // pred_region
    _
  $region21: #{metalearner_forward.1} parent=0 // pred_fallthru
    _
  %v20 = vld [vmem:[%s0] sm:$0x3f]
  %v21 = vld [vmem:[%s3] sm:$0xff]
  %v22 = vld [vmem:[%s3 + $0x8] sm:$0xff]
  %v23 = vld [vmem:[%s3 + $0x10] sm:$0xff]
  %v24 = vld [vmem:[%s3 + $0x18] sm:$0xff]
  %v25 = vld [vmem:[%s3 + $0x20] sm:$0xff]
  %v26 = vld [vmem:[%s3 + $0x28] sm:$0xff]
  %v27 = vld [vmem:[%s3 + $0x30] sm:$0xff]
  %v28 = vld [vmem:[%s3 + $0x38] sm:$0xff]
  %v29 = vld [vmem:[%s3 + $0x40] sm:$0xff]
  %31 = vset.pattern.permute.xlu0 2
  %32 = vperm.xlu0 %31, %v21
  %v33 = vpop.permute.xlu0 %32
  %36 = vset.pattern.permute.xlu0 2
  %37 = vperm.xlu0 %36, %v22
  %v38 = vpop.permute.xlu0 %37
  %41 = vset.pattern.permute.xlu0 2
  %42 = vperm.xlu0 %41, %v23
  %v43 = vpop.permute.xlu0 %42
  %46 = vset.pattern.permute.xlu0 2
  %47 = vperm.xlu0 %46, %v24
  %v48 = vpop.permute.xlu0 %47
  %51 = vset.pattern.permute.xlu0 2
  %52 = vperm.xlu0 %51, %v25
  %v53 = vpop.permute.xlu0 %52
  %56 = vset.pattern.permute.xlu0 2
  %57 = vperm.xlu0 %56, %v26
  %v58 = vpop.permute.xlu0 %57
  %61 = vset.pattern.permute.xlu0 2
  %62 = vperm.xlu0 %61, %v27
  %v63 = vpop.permute.xlu0 %62
  %66 = vset.pattern.permute.xlu0 2
  %67 = vperm.xlu0 %66, %v28
  %v68 = vpop.permute.xlu0 %67
  %71 = vset.pattern.permute.xlu0 2
  %72 = vperm.xlu0 %71, %v29
  %v73 = vpop.permute.xlu0 %72
  %v76 = vcombine.high %v20, %v20
  %v78 = vunpack.c.l.s4 1983009808
  %v79 = vunpack.c.0.s8 %v78
  %v80 = vlaneseq
  %v81 = vshrl.u32 %v80, 7
  %v82 = vsub.s32 %v79, %v81
  %v83 = vrot.slane %v20, %v82
  %v85 = vunpack.c.l.s4 1983009808
  %v86 = vunpack.c.0.s8 %v85
  %v87 = vlaneseq
  %v88 = vshrl.u32 %v87, 7
  %v89 = vsub.s32 %v86, %v88
  %v90 = vrot.slane %v76, %v89
  %v91 = vcombine.high %v83, %v83
  %vm92 = vcmask 15360
  %v93 = vsel %vm92, %v21, 0
  %v95 = vsel %vm92, %v22, 0
  %v97 = vsel %vm92, %v23, 0
  %v99 = vsel %vm92, %v24, 0
  %v101 = vsel %vm92, %v25, 0
  %v103 = vsel %vm92, %v26, 0
  %v105 = vsel %vm92, %v27, 0
  %v107 = vsel %vm92, %v28, 0
  %v109 = vsel %vm92, %v29, 0
  %vm111 = vcmask 1041408
  %v112 = vsel %vm111, %v83, 0
  %v114 = vsel %vm111, %v91, 0
  %v116 = vsel %vm111, %v90, 0
  %118 = vmatprep.subr.mxu0 %v114
  %119 = vmatpush1.msra.mxu0 %v112
  %120 = vmatprep.subr.mxu0 0.0
  %121 = vmatpush1.msra.mxu0 0.0
  %122 = vmatprep.subr.mxu0 0.0
  %123 = vmatpush1.msra.mxu0 0.0
  %124 = vmatprep.subr.mxu0 0.0
  %125 = vmatpush1.msra.mxu0 0.0
  %126 = vmatprep.subr.mxu0 0.0
  %127 = vmatpush1.msra.mxu0 0.0
  %128 = vmatprep.subr.mxu0 0.0
  %129 = vmatpush1.msra.mxu0 0.0
  %130 = vmatprep.subr.mxu0 0.0
  %131 = vmatpush1.msra.mxu0 0.0
  %132 = vmatprep.subr.mxu0 0.0
  %133 = vmatpush1.msra.mxu0 0.0
  %134 = vmatprep.subr.mxu0 0.0
  %135 = vmatpush1.msra.mxu0 0.0
  %136 = vmatprep.subr.mxu0 0.0
  %137 = vmatpush1.msra.mxu0 0.0
  %138 = vmatprep.subr.mxu0 0.0
  %139 = vmatpush1.msra.mxu0 0.0
  %140 = vmatprep.subr.mxu0 0.0
  %141 = vmatpush1.msra.mxu0 0.0
  %142 = vmatprep.subr.mxu0 0.0
  %143 = vmatpush1.msra.mxu0 0.0
  %144 = vmatprep.subr.mxu0 0.0
  %145 = vmatpush1.msra.mxu0 0.0
  %146 = vmatprep.subr.mxu0 0.0
  %147 = vmatpush1.msra.mxu0 0.0
  %148 = vmatprep.subr.mxu0 0.0
  %149 = vmatpush1.msra.mxu0 0.0
  %150 = vmatprep.subr.mxu0 0.0
  %151 = vmatpush1.msra.mxu0 0.0
  %152 = vmatprep.subr.mxu0 0.0
  %153 = vmatpush1.msra.mxu0 0.0
  %154 = vmatprep.subr.mxu0 0.0
  %155 = vmatpush1.msra.mxu0 0.0
  %156 = vmatprep.subr.mxu0 0.0
  %157 = vmatpush1.msra.mxu0 0.0
  %158 = vmatprep.subr.mxu0 0.0
  %159 = vmatpush1.msra.mxu0 0.0
  %160 = vmatprep.subr.mxu0 0.0
  %161 = vmatpush1.msra.mxu0 0.0
  %162 = vmatprep.subr.mxu0 0.0
  %163 = vmatpush1.msra.mxu0 0.0
  %164 = vmatprep.subr.mxu0 0.0
  %165 = vmatpush1.msra.mxu0 0.0
  %166 = vmatprep.subr.mxu0 0.0
  %167 = vmatpush1.msra.mxu0 0.0
  %168 = vmatprep.subr.mxu0 0.0
  %169 = vmatpush1.msra.mxu0 0.0
  %170 = vmatprep.subr.mxu0 0.0
  %171 = vmatpush1.msra.mxu0 0.0
  %172 = vmatprep.subr.mxu0 0.0
  %173 = vmatpush1.msra.mxu0 0.0
  %174 = vmatprep.subr.mxu0 0.0
  %175 = vmatpush1.msra.mxu0 0.0
  %176 = vmatprep.subr.mxu0 0.0
  %177 = vmatpush1.msra.mxu0 0.0
  %178 = vmatprep.subr.mxu0 0.0
  %179 = vmatpush1.msra.mxu0 0.0
  %180 = vmatprep.subr.mxu0 0.0
  %181 = vmatpush1.msra.mxu0 0.0
  %182 = vmatprep.mubr.f32.mxu0 0.0
  %183 = vmatmul.mubr.f32.gmra.mrb[0].mxu0 %v93
  %v184 = vpop.f32.mrb[0].mxu0
  %v185 = vadd.f32 %v33, %v184
  %v186 = vpop.f32.mrb[0].mxu0
  %v187 = vadd.f32 %v33, %v186
  %188 = vmatprep.mubr.f32.mxu0 0.0
  %189 = vmatmul.mubr.f32.gmra.mrb[0].mxu0 %v95
  %v190 = vpop.f32.mrb[0].mxu0
  %v191 = vadd.f32 %v38, %v190
  %v192 = vpop.f32.mrb[0].mxu0
  %v193 = vadd.f32 %v38, %v192
  %194 = vmatprep.mubr.f32.mxu0 0.0
  %195 = vmatmul.mubr.f32.gmra.mrb[0].mxu0 %v97
  %v196 = vpop.f32.mrb[0].mxu0
  %v197 = vadd.f32 %v43, %v196
  %v198 = vpop.f32.mrb[0].mxu0
  %v199 = vadd.f32 %v43, %v198
  %200 = vmatprep.mubr.f32.mxu0 0.0
  %201 = vmatmul.mubr.f32.gmra.mrb[0].mxu0 %v99
  %v202 = vpop.f32.mrb[0].mxu0
  %v203 = vadd.f32 %v48, %v202
  %v204 = vpop.f32.mrb[0].mxu0
  %v205 = vadd.f32 %v48, %v204
  %206 = vmatprep.mubr.f32.mxu0 0.0
  %207 = vmatmul.mubr.f32.gmra.mrb[0].mxu0 %v101
  %v208 = vpop.f32.mrb[0].mxu0
  %v209 = vadd.f32 %v53, %v208
  %v210 = vpop.f32.mrb[0].mxu0
  %v211 = vadd.f32 %v53, %v210
  %212 = vmatprep.mubr.f32.mxu0 0.0
  %213 = vmatmul.mubr.f32.gmra.mrb[0].mxu0 %v103
  %v214 = vpop.f32.mrb[0].mxu0
  %v215 = vadd.f32 %v58, %v214
  %v216 = vpop.f32.mrb[0].mxu0
  %v217 = vadd.f32 %v58, %v216
  %218 = vmatprep.mubr.f32.mxu0 0.0
  %219 = vmatmul.mubr.f32.gmra.mrb[0].mxu0 %v105
  %v220 = vpop.f32.mrb[0].mxu0
  %v221 = vadd.f32 %v63, %v220
  %v222 = vpop.f32.mrb[0].mxu0
  %v223 = vadd.f32 %v63, %v222
  %224 = vmatprep.mubr.f32.mxu0 0.0
  %225 = vmatmul.mubr.f32.gmra.mrb[0].mxu0 %v107
  %v226 = vpop.f32.mrb[0].mxu0
  %v227 = vadd.f32 %v68, %v226
  %v228 = vpop.f32.mrb[0].mxu0
  %v229 = vadd.f32 %v68, %v228
  %230 = vmatprep.mubr.f32.mxu0 0.0
  %231 = vmatmul.mubr.f32.gmra.mrb[0].mxu0 %v109
  %v232 = vpop.f32.mrb[0].mxu0
  %v233 = vadd.f32 %v73, %v232
  %v234 = vpop.f32.mrb[0].mxu0
  %v235 = vadd.f32 %v73, %v234
  %236 = vdwg.mxu0
  %237 = vmatprep.subr.mxu0 0.0
  %238 = vmatpush1.msra.mxu0 %v116
  %239 = vmatprep.subr.mxu0 0.0
  %240 = vmatpush1.msra.mxu0 0.0
  %241 = vmatprep.subr.mxu0 0.0
  %242 = vmatpush1.msra.mxu0 0.0
  %243 = vmatprep.subr.mxu0 0.0
  %244 = vmatpush1.msra.mxu0 0.0
  %245 = vmatprep.subr.mxu0 0.0
  %246 = vmatpush1.msra.mxu0 0.0
  %247 = vmatprep.subr.mxu0 0.0
  %248 = vmatpush1.msra.mxu0 0.0
  %249 = vmatprep.subr.mxu0 0.0
  %250 = vmatpush1.msra.mxu0 0.0
  %251 = vmatprep.subr.mxu0 0.0
  %252 = vmatpush1.msra.mxu0 0.0
  %253 = vmatprep.subr.mxu0 0.0
  %254 = vmatpush1.msra.mxu0 0.0
  %255 = vmatprep.subr.mxu0 0.0
  %256 = vmatpush1.msra.mxu0 0.0
  %257 = vmatprep.subr.mxu0 0.0
  %258 = vmatpush1.msra.mxu0 0.0
  %259 = vmatprep.subr.mxu0 0.0
  %260 = vmatpush1.msra.mxu0 0.0
  %261 = vmatprep.subr.mxu0 0.0
  %262 = vmatpush1.msra.mxu0 0.0
  %263 = vmatprep.subr.mxu0 0.0
  %264 = vmatpush1.msra.mxu0 0.0
  %265 = vmatprep.subr.mxu0 0.0
  %266 = vmatpush1.msra.mxu0 0.0
  %267 = vmatprep.subr.mxu0 0.0
  %268 = vmatpush1.msra.mxu0 0.0
  %269 = vmatprep.subr.mxu0 0.0
  %270 = vmatpush1.msra.mxu0 0.0
  %271 = vmatprep.subr.mxu0 0.0
  %272 = vmatpush1.msra.mxu0 0.0
  %273 = vmatprep.subr.mxu0 0.0
  %274 = vmatpush1.msra.mxu0 0.0
  %275 = vmatprep.subr.mxu0 0.0
  %276 = vmatpush1.msra.mxu0 0.0
  %277 = vmatprep.subr.mxu0 0.0
  %278 = vmatpush1.msra.mxu0 0.0
  %279 = vmatprep.subr.mxu0 0.0
  %280 = vmatpush1.msra.mxu0 0.0
  %281 = vmatprep.subr.mxu0 0.0
  %282 = vmatpush1.msra.mxu0 0.0
  %283 = vmatprep.subr.mxu0 0.0
  %284 = vmatpush1.msra.mxu0 0.0
  %285 = vmatprep.subr.mxu0 0.0
  %286 = vmatpush1.msra.mxu0 0.0
  %287 = vmatprep.subr.mxu0 0.0
  %288 = vmatpush1.msra.mxu0 0.0
  %289 = vmatprep.subr.mxu0 0.0
  %290 = vmatpush1.msra.mxu0 0.0
  %291 = vmatprep.subr.mxu0 0.0
  %292 = vmatpush1.msra.mxu0 0.0
  %293 = vmatprep.subr.mxu0 0.0
  %294 = vmatpush1.msra.mxu0 0.0
  %295 = vmatprep.subr.mxu0 0.0
  %296 = vmatpush1.msra.mxu0 0.0
  %297 = vmatprep.subr.mxu0 0.0
  %298 = vmatpush1.msra.mxu0 0.0
  %299 = vmatprep.subr.mxu0 0.0
  %300 = vmatpush1.msra.mxu0 0.0
  %301 = vmatprep.mubr.f32.mxu0 0.0
  %302 = vmatmul.mubr.f32.gmra.mrb[0].mxu0 %v93
  %v303 = vpop.f32.mrb[0].mxu0
  %v304 = vadd.f32 %v33, %v303
  %v305 = vpop.f32.mrb[0].mxu0
  %306 = vmatprep.mubr.f32.mxu0 0.0
  %307 = vmatmul.mubr.f32.gmra.mrb[0].mxu0 %v95
  %v308 = vpop.f32.mrb[0].mxu0
  %v309 = vadd.f32 %v38, %v308
  %v310 = vpop.f32.mrb[0].mxu0
  %311 = vmatprep.mubr.f32.mxu0 0.0
  %312 = vmatmul.mubr.f32.gmra.mrb[0].mxu0 %v97
  %v313 = vpop.f32.mrb[0].mxu0
  %v314 = vadd.f32 %v43, %v313
  %v315 = vpop.f32.mrb[0].mxu0
  %316 = vmatprep.mubr.f32.mxu0 0.0
  %317 = vmatmul.mubr.f32.gmra.mrb[0].mxu0 %v99
  %v318 = vpop.f32.mrb[0].mxu0
  %v319 = vadd.f32 %v48, %v318
  %v320 = vpop.f32.mrb[0].mxu0
  %321 = vmatprep.mubr.f32.mxu0 0.0
  %322 = vmatmul.mubr.f32.gmra.mrb[0].mxu0 %v101
  %v323 = vpop.f32.mrb[0].mxu0
  %v324 = vadd.f32 %v53, %v323
  %v325 = vpop.f32.mrb[0].mxu0
  %326 = vmatprep.mubr.f32.mxu0 0.0
  %327 = vmatmul.mubr.f32.gmra.mrb[0].mxu0 %v103
  %v328 = vpop.f32.mrb[0].mxu0
  %v329 = vadd.f32 %v58, %v328
  %v330 = vpop.f32.mrb[0].mxu0
  %331 = vmatprep.mubr.f32.mxu0 0.0
  %332 = vmatmul.mubr.f32.gmra.mrb[0].mxu0 %v105
  %v333 = vpop.f32.mrb[0].mxu0
  %v334 = vadd.f32 %v63, %v333
  %v335 = vpop.f32.mrb[0].mxu0
  %336 = vmatprep.mubr.f32.mxu0 0.0
  %337 = vmatmul.mubr.f32.gmra.mrb[0].mxu0 %v107
  %v338 = vpop.f32.mrb[0].mxu0
  %v339 = vadd.f32 %v68, %v338
  %v340 = vpop.f32.mrb[0].mxu0
  %341 = vmatprep.mubr.f32.mxu0 0.0
  %342 = vmatmul.mubr.f32.gmra.mrb[0].mxu0 %v109
  %v343 = vpop.f32.mrb[0].mxu0
  %v344 = vadd.f32 %v73, %v343
  %v345 = vpop.f32.mrb[0].mxu0
  %346 = vdwg.mxu0
  %v347 = vxor.u32 %v185, 2147483648
  %v348 = vxor.u32 %v187, 2147483648
  %v349 = vxor.u32 %v304, 2147483648
  %v350 = vxor.u32 %v191, 2147483648
  %v351 = vxor.u32 %v193, 2147483648
  %v352 = vxor.u32 %v309, 2147483648
  %v353 = vxor.u32 %v197, 2147483648
  %v354 = vxor.u32 %v199, 2147483648
  %v355 = vxor.u32 %v314, 2147483648
  %v356 = vxor.u32 %v203, 2147483648
  %v357 = vxor.u32 %v205, 2147483648
  %v358 = vxor.u32 %v319, 2147483648
  %v359 = vxor.u32 %v209, 2147483648
  %v360 = vxor.u32 %v211, 2147483648
  %v361 = vxor.u32 %v324, 2147483648
  %v362 = vxor.u32 %v215, 2147483648
  %v363 = vxor.u32 %v217, 2147483648
  %v364 = vxor.u32 %v329, 2147483648
  %v365 = vmul.f32 %v347, 1.442695
  %v366 = vpow.pop %v365
  %v367 = vmul.f32 %v348, 1.442695
  %v368 = vpow.pop %v367
  %v369 = vmul.f32 %v349, 1.442695
  %v370 = vpow.pop %v369
  %v371 = vmul.f32 %v350, 1.442695
  %v372 = vpow.pop %v371
  %v373 = vmul.f32 %v351, 1.442695
  %v374 = vpow.pop %v373
  %v375 = vmul.f32 %v352, 1.442695
  %v376 = vpow.pop %v375
  %v377 = vmul.f32 %v353, 1.442695
  %v378 = vpow.pop %v377
  %v379 = vmul.f32 %v354, 1.442695
  %v380 = vpow.pop %v379
  %v381 = vmul.f32 %v355, 1.442695
  %v382 = vpow.pop %v381
  %v383 = vmul.f32 %v356, 1.442695
  %v384 = vpow.pop %v383
  %v385 = vmul.f32 %v357, 1.442695
  %v386 = vpow.pop %v385
  %v387 = vmul.f32 %v358, 1.442695
  %v388 = vpow.pop %v387
  %v389 = vmul.f32 %v359, 1.442695
  %v390 = vpow.pop %v389
  %v391 = vmul.f32 %v360, 1.442695
  %v392 = vpow.pop %v391
  %v393 = vmul.f32 %v361, 1.442695
  %v394 = vpow.pop %v393
  %v395 = vmul.f32 %v362, 1.442695
  %v396 = vpow.pop %v395
  %v397 = vmul.f32 %v363, 1.442695
  %v398 = vpow.pop %v397
  %v399 = vmul.f32 %v364, 1.442695
  %v400 = vpow.pop %v399
  %v401 = vadd.f32 %v366, 1.0
  %v402 = vadd.f32 %v368, 1.0
  %v403 = vadd.f32 %v370, 1.0
  %v404 = vadd.f32 %v372, 1.0
  %v405 = vadd.f32 %v374, 1.0
  %v406 = vadd.f32 %v376, 1.0
  %v407 = vadd.f32 %v378, 1.0
  %v408 = vadd.f32 %v380, 1.0
  %v409 = vadd.f32 %v382, 1.0
  %v410 = vadd.f32 %v384, 1.0
  %v411 = vadd.f32 %v386, 1.0
  %v412 = vadd.f32 %v388, 1.0
  %v413 = vadd.f32 %v390, 1.0
  %v414 = vadd.f32 %v392, 1.0
  %v415 = vadd.f32 %v394, 1.0
  %v416 = vadd.f32 %v396, 1.0
  %v417 = vadd.f32 %v398, 1.0
  %v418 = vadd.f32 %v400, 1.0
  %v419 = vrcp.pop %v401
  %v420 = vmul.f32 1.0, %v419
  %v421 = vrcp.pop %v402
  %v422 = vmul.f32 1.0, %v421
  %v423 = vrcp.pop %v403
  %v424 = vmul.f32 1.0, %v423
  %v425 = vrcp.pop %v404
  %v426 = vmul.f32 1.0, %v425
  %v427 = vrcp.pop %v405
  %v428 = vmul.f32 1.0, %v427
  %v429 = vrcp.pop %v406
  %v430 = vmul.f32 1.0, %v429
  %v431 = vrcp.pop %v407
  %v432 = vmul.f32 1.0, %v431
  %v433 = vrcp.pop %v408
  %v434 = vmul.f32 1.0, %v433
  %v435 = vrcp.pop %v409
  %v436 = vmul.f32 1.0, %v435
  %v437 = vrcp.pop %v410
  %v438 = vmul.f32 1.0, %v437
  %v439 = vrcp.pop %v411
  %v440 = vmul.f32 1.0, %v439
  %v441 = vrcp.pop %v412
  %v442 = vmul.f32 1.0, %v441
  %v443 = vrcp.pop %v413
  %v444 = vmul.f32 1.0, %v443
  %v445 = vrcp.pop %v414
  %v446 = vmul.f32 1.0, %v445
  %v447 = vrcp.pop %v415
  %v448 = vmul.f32 1.0, %v447
  %v449 = vrcp.pop %v416
  %v450 = vmul.f32 1.0, %v449
  %v451 = vrcp.pop %v417
  %v452 = vmul.f32 1.0, %v451
  %v453 = vrcp.pop %v418
  %v454 = vmul.f32 1.0, %v453
  %v455 = vtanh.pop %v221
  %v456 = vtanh.pop %v223
  %v457 = vtanh.pop %v334
  %v458 = vtanh.pop %v227
  %v459 = vtanh.pop %v229
  %v460 = vtanh.pop %v339
  %v461 = vtanh.pop %v233
  %v462 = vtanh.pop %v235
  %v463 = vtanh.pop %v344
  %v464 = vmul.f32 %v420, %v455
  %v465 = vmul.f32 %v422, %v456
  %v466 = vmul.f32 %v424, %v457
  %v467 = vmul.f32 %v426, %v458
  %v468 = vmul.f32 %v428, %v459
  %v469 = vmul.f32 %v430, %v460
  %v470 = vmul.f32 %v432, %v461
  %v471 = vmul.f32 %v434, %v462
  %v472 = vmul.f32 %v436, %v463
  %v473 = vtanh.pop %v464
  %v474 = vtanh.pop %v465
  %v475 = vtanh.pop %v466
  %v476 = vtanh.pop %v467
  %v477 = vtanh.pop %v468
  %v478 = vtanh.pop %v469
  %v479 = vtanh.pop %v470
  %v480 = vtanh.pop %v471
  %v481 = vtanh.pop %v472
  %v482 = vmul.f32 %v438, %v473
  %v483 = vmul.f32 %v440, %v474
  %v484 = vmul.f32 %v442, %v475
  %v485 = vmul.f32 %v444, %v476
  %v486 = vmul.f32 %v446, %v477
  %v487 = vmul.f32 %v448, %v478
  %v488 = vmul.f32 %v450, %v479
  %v489 = vmul.f32 %v452, %v480
  %v490 = vmul.f32 %v454, %v481
  %v491 = vld [vmem:[%s1] sm:$0x7]
  %v492 = vld [vmem:[%s2] sm:$0x7]
  %v493 = vld [vmem:[%s4] sm:$0x3]
  %495 = vset.pattern.permute.xlu0 20
  %496 = vperm.xlu0 %495, %v493
  %v497 = vpop.permute.xlu0 %496
  %v500 = vlaneseq
  %v501 = vshrl.u32 %v500, 7
  %v502 = vsub.s32 0, %v501
  %v503 = vrot.slane %v491, %v502
  %v504 = vlaneseq
  %v505 = vshrl.u32 %v504, 7
  %v506 = vsub.s32 1, %v505
  %v507 = vrot.slane %v491, %v506
  %v508 = vlaneseq
  %v509 = vshrl.u32 %v508, 7
  %v510 = vsub.s32 2, %v509
  %v511 = vrot.slane %v491, %v510
  %v515 = vmul.f32 %v497, %v503
  %v516 = vmul.f32 %v497, %v507
  %v517 = vmul.f32 %v497, %v511
  %vm518 = vcmask 162816
  %v519 = vsel %vm518, %v493, 0
  %vm521 = vcmask 1043456
  %v523 = vsel %vm521, %v488, 0
  %v526 = vsel %vm521, %v489, 0
  %v529 = vsel %vm521, %v490, 0
  %531 = vmatprep.subr.mxu0 %v483
  %532 = vmatpush1.msra.mxu0 %v482
  %533 = vmatprep.subr.mxu0 %v486
  %534 = vmatpush1.msra.mxu0 %v485
  %535 = vmatprep.subr.mxu0 %v526
  %536 = vmatpush1.msra.mxu0 %v523
  %537 = vmatprep.subr.mxu0 0.0
  %538 = vmatpush1.msra.mxu0 0.0
  %539 = vmatprep.subr.mxu0 0.0
  %540 = vmatpush1.msra.mxu0 0.0
  %541 = vmatprep.subr.mxu0 0.0
  %542 = vmatpush1.msra.mxu0 0.0
  %543 = vmatprep.subr.mxu0 0.0
  %544 = vmatpush1.msra.mxu0 0.0
  %545 = vmatprep.subr.mxu0 0.0
  %546 = vmatpush1.msra.mxu0 0.0
  %547 = vmatprep.subr.mxu0 0.0
  %548 = vmatpush1.msra.mxu0 0.0
  %549 = vmatprep.subr.mxu0 0.0
  %550 = vmatpush1.msra.mxu0 0.0
  %551 = vmatprep.subr.mxu0 0.0
  %552 = vmatpush1.msra.mxu0 0.0
  %553 = vmatprep.subr.mxu0 0.0
  %554 = vmatpush1.msra.mxu0 0.0
  %555 = vmatprep.subr.mxu0 0.0
  %556 = vmatpush1.msra.mxu0 0.0
  %557 = vmatprep.subr.mxu0 0.0
  %558 = vmatpush1.msra.mxu0 0.0
  %559 = vmatprep.subr.mxu0 0.0
  %560 = vmatpush1.msra.mxu0 0.0
  %561 = vmatprep.subr.mxu0 0.0
  %562 = vmatpush1.msra.mxu0 0.0
  %563 = vmatprep.subr.mxu0 0.0
  %564 = vmatpush1.msra.mxu0 0.0
  %565 = vmatprep.subr.mxu0 0.0
  %566 = vmatpush1.msra.mxu0 0.0
  %567 = vmatprep.subr.mxu0 0.0
  %568 = vmatpush1.msra.mxu0 0.0
  %569 = vmatprep.subr.mxu0 0.0
  %570 = vmatpush1.msra.mxu0 0.0
  %571 = vmatprep.subr.mxu0 0.0
  %572 = vmatpush1.msra.mxu0 0.0
  %573 = vmatprep.subr.mxu0 0.0
  %574 = vmatpush1.msra.mxu0 0.0
  %575 = vmatprep.subr.mxu0 0.0
  %576 = vmatpush1.msra.mxu0 0.0
  %577 = vmatprep.subr.mxu0 0.0
  %578 = vmatpush1.msra.mxu0 0.0
  %579 = vmatprep.subr.mxu0 0.0
  %580 = vmatpush1.msra.mxu0 0.0
  %581 = vmatprep.subr.mxu0 0.0
  %582 = vmatpush1.msra.mxu0 0.0
  %583 = vmatprep.subr.mxu0 0.0
  %584 = vmatpush1.msra.mxu0 0.0
  %585 = vmatprep.subr.mxu0 0.0
  %586 = vmatpush1.msra.mxu0 0.0
  %587 = vmatprep.subr.mxu0 0.0
  %588 = vmatpush1.msra.mxu0 0.0
  %589 = vmatprep.subr.mxu0 0.0
  %590 = vmatpush1.msra.mxu0 0.0
  %591 = vmatprep.subr.mxu0 0.0
  %592 = vmatpush1.msra.mxu0 0.0
  %593 = vmatprep.subr.mxu0 0.0
  %594 = vmatpush1.msra.mxu0 0.0
  %595 = vmatprep.mubr.f32.mxu0 0.0
  %596 = vmatmul.mubr.f32.gmra.mrb[0].mxu0 %v519
  %v597 = vpop.f32.mrb[0].mxu0
  %v598 = vadd.f32 %v515, %v597
  %v599 = vpop.f32.mrb[0].mxu0
  %v600 = vadd.f32 %v516, %v599
  %601 = vdwg.mxu0
  %602 = vmatprep.subr.mxu0 0.0
  %603 = vmatpush1.msra.mxu0 %v484
  %604 = vmatprep.subr.mxu0 0.0
  %605 = vmatpush1.msra.mxu0 %v487
  %606 = vmatprep.subr.mxu0 0.0
  %607 = vmatpush1.msra.mxu0 %v529
  %608 = vmatprep.subr.mxu0 0.0
  %609 = vmatpush1.msra.mxu0 0.0
  %610 = vmatprep.subr.mxu0 0.0
  %611 = vmatpush1.msra.mxu0 0.0
  %612 = vmatprep.subr.mxu0 0.0
  %613 = vmatpush1.msra.mxu0 0.0
  %614 = vmatprep.subr.mxu0 0.0
  %615 = vmatpush1.msra.mxu0 0.0
  %616 = vmatprep.subr.mxu0 0.0
  %617 = vmatpush1.msra.mxu0 0.0
  %618 = vmatprep.subr.mxu0 0.0
  %619 = vmatpush1.msra.mxu0 0.0
  %620 = vmatprep.subr.mxu0 0.0
  %621 = vmatpush1.msra.mxu0 0.0
  %622 = vmatprep.subr.mxu0 0.0
  %623 = vmatpush1.msra.mxu0 0.0
  %624 = vmatprep.subr.mxu0 0.0
  %625 = vmatpush1.msra.mxu0 0.0
  %626 = vmatprep.subr.mxu0 0.0
  %627 = vmatpush1.msra.mxu0 0.0
  %628 = vmatprep.subr.mxu0 0.0
  %629 = vmatpush1.msra.mxu0 0.0
  %630 = vmatprep.subr.mxu0 0.0
  %631 = vmatpush1.msra.mxu0 0.0
  %632 = vmatprep.subr.mxu0 0.0
  %633 = vmatpush1.msra.mxu0 0.0
  %634 = vmatprep.subr.mxu0 0.0
  %635 = vmatpush1.msra.mxu0 0.0
  %636 = vmatprep.subr.mxu0 0.0
  %637 = vmatpush1.msra.mxu0 0.0
  %638 = vmatprep.subr.mxu0 0.0
  %639 = vmatpush1.msra.mxu0 0.0
  %640 = vmatprep.subr.mxu0 0.0
  %641 = vmatpush1.msra.mxu0 0.0
  %642 = vmatprep.subr.mxu0 0.0
  %643 = vmatpush1.msra.mxu0 0.0
  %644 = vmatprep.subr.mxu0 0.0
  %645 = vmatpush1.msra.mxu0 0.0
  %646 = vmatprep.subr.mxu0 0.0
  %647 = vmatpush1.msra.mxu0 0.0
  %648 = vmatprep.subr.mxu0 0.0
  %649 = vmatpush1.msra.mxu0 0.0
  %650 = vmatprep.subr.mxu0 0.0
  %651 = vmatpush1.msra.mxu0 0.0
  %652 = vmatprep.subr.mxu0 0.0
  %653 = vmatpush1.msra.mxu0 0.0
  %654 = vmatprep.subr.mxu0 0.0
  %655 = vmatpush1.msra.mxu0 0.0
  %656 = vmatprep.subr.mxu0 0.0
  %657 = vmatpush1.msra.mxu0 0.0
  %658 = vmatprep.subr.mxu0 0.0
  %659 = vmatpush1.msra.mxu0 0.0
  %660 = vmatprep.subr.mxu0 0.0
  %661 = vmatpush1.msra.mxu0 0.0
  %662 = vmatprep.subr.mxu0 0.0
  %663 = vmatpush1.msra.mxu0 0.0
  %664 = vmatprep.subr.mxu0 0.0
  %665 = vmatpush1.msra.mxu0 0.0
  %666 = vmatprep.mubr.f32.mxu0 0.0
  %667 = vmatmul.mubr.f32.gmra.mrb[0].mxu0 %v519
  %v668 = vpop.f32.mrb[0].mxu0
  %v669 = vadd.f32 %v517, %v668
  %v670 = vpop.f32.mrb[0].mxu0
  %671 = vdwg.mxu0
  %672 = vset.pattern.permute.xlu0 21
  %673 = vperm.xlu0 %672, %v493
  %v674 = vpop.permute.xlu0 %673
  %v676 = vadd.f32 %v598, %v674
  %v677 = vadd.f32 %v600, %v674
  %v678 = vadd.f32 %v669, %v674
  %v679 = vxor.u32 %v676, 2147483648
  %v680 = vxor.u32 %v677, 2147483648
  %v681 = vxor.u32 %v678, 2147483648
  %v682 = vmul.f32 %v679, 1.442695
  %v683 = vpow.pop %v682
  %v684 = vmul.f32 %v680, 1.442695
  %v685 = vpow.pop %v684
  %v686 = vmul.f32 %v681, 1.442695
  %v687 = vpow.pop %v686
  %v688 = vadd.f32 %v683, 1.0
  %v689 = vadd.f32 %v685, 1.0
  %v690 = vadd.f32 %v687, 1.0
  %v691 = vrcp.pop %v688
  %v692 = vmul.f32 1.0, %v691
  %v693 = vrcp.pop %v689
  %v694 = vmul.f32 1.0, %v693
  %v695 = vrcp.pop %v690
  %v696 = vmul.f32 1.0, %v695
  %v697 = vmul.f32 %v692, %v503
  %v698 = vmul.f32 %v694, %v507
  %v699 = vmul.f32 %v696, %v511
  %v701 = vlaneseq
  %v702 = vshrl.u32 %v701, 7
  %v703 = vsub.s32 0, %v702
  %v704 = vrot.slane %v492, %v703
  %v705 = vlaneseq
  %v706 = vshrl.u32 %v705, 7
  %v707 = vsub.s32 1, %v706
  %v708 = vrot.slane %v492, %v707
  %v709 = vlaneseq
  %v710 = vshrl.u32 %v709, 7
  %v711 = vsub.s32 2, %v710
  %v712 = vrot.slane %v492, %v711
  %v716 = vmul.f32 %v692, %v704
  %v717 = vmul.f32 %v694, %v708
  %v718 = vmul.f32 %v696, %v712
  %v722 = vrot.slane %v716, 1
  %v723 = vrot.slane %v717, 1
  %v724 = vrot.slane %v718, 1
  %v728 = vsub.f32 %v697, %v722
  %v729 = vsub.f32 %v698, %v723
  %v730 = vsub.f32 %v699, %v724
  %731 = vst [vmem:[%s5] sm:$0xff] %v482
  %732 = vst [vmem:[%s5 + $0x8] sm:$0xff] %v483
  %733 = vst [vmem:[%s5 + $0x10] sm:$0xff] %v484
  %734 = vst [vmem:[%s5 + $0x18] sm:$0xff] %v485
  %735 = vst [vmem:[%s5 + $0x20] sm:$0xff] %v486
  %736 = vst [vmem:[%s5 + $0x28] sm:$0xff] %v487
  %737 = vst [vmem:[%s5 + $0x30] sm:$0xf] %v488
  %738 = vst [vmem:[%s5 + $0x38] sm:$0xf] %v489
  %739 = vst [vmem:[%s5 + $0x40] sm:$0xf] %v490
  %v749 = vrot.slane %v464, 4
  %v750 = vrot.slane %v465, 4
  %v751 = vrot.slane %v466, 4
  %v752 = vrot.slane %v467, 4
  %v753 = vsel %vm521, %v749, %v752
  %v754 = vrot.slane %v468, 4
  %v755 = vsel %vm521, %v750, %v754
  %v756 = vrot.slane %v469, 4
  %v757 = vsel %vm521, %v751, %v756
  %v758 = vrot.slane %v470, 4
  %v759 = vsel %vm521, %v752, %v758
  %v760 = vrot.slane %v471, 4
  %v761 = vsel %vm521, %v754, %v760
  %v762 = vrot.slane %v472, 4
  %v763 = vsel %vm521, %v756, %v762
  %773 = vst [vmem:[%s5 + $0x30] sm:$0xf0] %v749
  %774 = vst [vmem:[%s5 + $0x38] sm:$0xf0] %v750
  %775 = vst [vmem:[%s5 + $0x40] sm:$0xf0] %v751
  %776 = vst [vmem:[%s5 + $0x48] sm:$0xff] %v753
  %777 = vst [vmem:[%s5 + $0x50] sm:$0xff] %v755
  %778 = vst [vmem:[%s5 + $0x58] sm:$0xff] %v757
  %779 = vst [vmem:[%s5 + $0x60] sm:$0xff] %v759
  %780 = vst [vmem:[%s5 + $0x68] sm:$0xff] %v761
  %781 = vst [vmem:[%s5 + $0x70] sm:$0xff] %v763
  %782 = vst [vmem:[%s5 + $0x78] sm:$0x3] %v692
  %783 = vst [vmem:[%s5 + $0x80] sm:$0x3] %v694
  %784 = vst [vmem:[%s5 + $0x88] sm:$0x3] %v696
  %v788 = vcombine.low %v728, %v729
  %v790 = vunpack.c.l.s4 1966171168
  %v791 = vunpack.c.0.s8 %v790
  %v792 = vlaneseq
  %v793 = vshrl.u32 %v792, 7
  %v794 = vsub.s32 %v791, %v793
  %v795 = vrot.slane %v788, %v794
  %v797 = vunpack.c.l.s4 1966171168
  %v798 = vunpack.c.0.s8 %v797
  %v799 = vlaneseq
  %v800 = vshrl.u32 %v799, 7
  %v801 = vsub.s32 %v798, %v800
  %v802 = vrot.slane %v730, %v801
  %v803 = vcombine.low %v795, %v802
  %v805 = vunpack.c.l.s4 1966171168
  %v806 = vunpack.c.0.s8 %v805
  %v807 = vlaneseq
  %v808 = vshrl.u32 %v807, 7
  %v809 = vsub.s32 %v806, %v808
  %v810 = vrot.slane %v803, %v809
  %v812 = vlaneseq
  %vm813 = vcmp.ge.s32.totalorder %v812, 0
  %vm814 = vcmp.lt.s32.totalorder %v812, 384
  %vm815 = vmand %vm813, %vm814
  %s816 = scalar_lea.vmem %s5, 122
  %817 = vst.msk [vmem:[%s816] ss:$8 sm:$0x7] %vm815, %v810
  %818 = vst.msk [vmem:[%s816] ss:$8 sm:$0x0] %vm815, %v810
  // Predicated region
  $region22: #{metalearner_forward.1} parent=0 // pred_check
    _
  $region23: #{metalearner_forward.1} parent=0 // pred_check_branch
    %820 = sbr.rel (0) target = $region25
  $region24: #{metalearner_forward.1} parent=0 // pred_region
    _
  $region25: #{metalearner_forward.1} parent=0 // pred_fallthru
    _
  // Predicated region
  $region26: #{metalearner_forward.1} parent=0 // pred_check
    _
  $region27: #{metalearner_forward.1} parent=0 // pred_check_branch
    %822 = sbr.rel (0) target = $region29
  $region28: #{metalearner_forward.1} parent=0 // pred_region
    _
  $region29: #{metalearner_forward.1} parent=0 // pred_fallthru
    _

</llo_original>
